<compile_context>
chip_gen: v6e
topology: v6e:2x2x1
jax: 0.10.0
libtpu: 0.0.40
codegen_flags: <defaults>
</compile_context>

<pallas_src>
import jax
import jax.numpy as jnp
from jax.experimental import pallas as pl
from jax.experimental.pallas import tpu as pltpu


def _net_kernel(x_ref, w1_ref, b1_ref, nw2_ref, nb2_ref, o_ref):
    # x_ref  : VMEM (2, TR, 128) -- feature-planar, batch dense on sublanes+lanes
    # w1_ref : SMEM (6,)  row-major flatten of W1 with layout (in=2, out=3)
    # b1_ref : SMEM (3,)
    # nw2_ref: SMEM (3,)  = -W2[:, 0]
    # nb2_ref: SMEM (1,)  = -b2
    # o_ref  : VMEM (TR, 128)
    x0 = x_ref[0]  # (TR, 128)
    x1 = x_ref[1]  # (TR, 128)

    # -z = sum_j relu(x0*W1[0,j] + x1*W1[1,j] + b1[j]) * (-W2[j]) + (-b2)   (pure VPU)
    h = jnp.maximum(x0 * w1_ref[0] + x1 * w1_ref[3] + b1_ref[0], 0.0)
    zneg = h * nw2_ref[0] + nb2_ref[0]
    for j in range(1, 3):
        h = jnp.maximum(x0 * w1_ref[j] + x1 * w1_ref[3 + j] + b1_ref[j], 0.0)
        zneg = zneg + h * nw2_ref[j]

    # sigmoid(z) = 1 / (1 + exp(-z)); exp + reciprocal land on the EUP slot.
    o_ref[...] = pl.reciprocal(1.0 + jnp.exp(zneg))


def net_forward(x, w1, b1, w2, b2, *, tr=4096):
    """x: (B, 2); w1: (2,3); b1: (3,); w2: (3,1); b2: (1,). Returns (B, 1)."""
    B = x.shape[0]
    LANES, SUBS = 128, 8

    # Rows of the packed (R, 128) batch slab; R must be a multiple of 8.
    r_min = (-(-B // LANES) + SUBS - 1) // SUBS * SUBS
    tr = max(SUBS, (tr // SUBS) * SUBS)
    tr = min(tr, r_min)
    # Keep >= 2 grid steps when possible so both v7x TensorCores get work.
    if r_min > SUBS and tr == r_min:
        tr = ((r_min // 2 + SUBS - 1) // SUBS) * SUBS
    r_pad = ((r_min + tr - 1) // tr) * tr
    b_pad = r_pad * LANES

    # Feature-planar layout copy (pad fuses with it in XLA).
    # TODO(synk): this HBM copy disappears if the producer supplies x already
    # feature-planar as (2, B) / two (B,) feature vectors.
    xt = jnp.asarray(x, jnp.float32).T            # (2, B)
    if b_pad != B:
        xt = jnp.pad(xt, ((0, 0), (0, b_pad - B)))
    x3 = xt.reshape(2, r_pad, LANES)              # free row-major reshape

    w1f = jnp.asarray(w1, jnp.float32).reshape(-1)    # (6,)
    b1f = jnp.asarray(b1, jnp.float32).reshape(-1)    # (3,)
    nw2 = -jnp.asarray(w2, jnp.float32).reshape(-1)   # (3,)  negated
    nb2 = -jnp.asarray(b2, jnp.float32).reshape(-1)   # (1,)  negated

    out = pl.pallas_call(
        _net_kernel,
        out_shape=jax.ShapeDtypeStruct((r_pad, LANES), jnp.float32),
        grid=(r_pad // tr,),
        in_specs=[
            pl.BlockSpec((2, tr, LANES), lambda i: (0, i, 0)),     # dense x slab
            pl.BlockSpec(memory_space=pltpu.MemorySpace.SMEM),     # w1 (6,)
            pl.BlockSpec(memory_space=pltpu.MemorySpace.SMEM),     # b1 (3,)
            pl.BlockSpec(memory_space=pltpu.MemorySpace.SMEM),     # -w2 (3,)
            pl.BlockSpec(memory_space=pltpu.MemorySpace.SMEM),     # -b2 (1,)
        ],
        out_specs=pl.BlockSpec((tr, LANES), lambda i: (i, 0)),     # dense store
        compiler_params=pltpu.CompilerParams(
            dimension_semantics=("parallel",),          # batch rows independent
            vmem_limit_bytes=32 * 1024 * 1024,          # explicit, v7x-safe budget
        ),
    )(x3, w1f, b1f, nw2, nb2)

    # Free reshape; the slice only copies when padding was added.
    return out.reshape(-1)[:B].reshape(B, 1).astype(x.dtype)


def init_params(key):
    """PyTorch nn.Linear default init: U(-1/sqrt(fan_in), +1/sqrt(fan_in))."""
    k1, k2, k3, k4 = jax.random.split(key, 4)
    bound1 = 1.0 / jnp.sqrt(2.0)   # hidden: fan_in = 2
    bound2 = 1.0 / jnp.sqrt(3.0)   # out:    fan_in = 3
    # stored as (in, out) so the math is x @ W
    w1 = jax.random.uniform(k1, (2, 3), jnp.float32, -bound1, bound1)
    b1 = jax.random.uniform(k2, (3,), jnp.float32, -bound1, bound1)
    w2 = jax.random.uniform(k3, (3, 1), jnp.float32, -bound2, bound2)
    b2 = jax.random.uniform(k4, (1,), jnp.float32, -bound2, bound2)
    return w1, b1, w2, b2


if __name__ == "__main__":
    key = jax.random.PRNGKey(0)
    kx, kp = jax.random.split(key)

    B = 8
    x = jax.random.normal(kx, (B, 2), dtype=jnp.float32)
    w1, b1, w2, b2 = init_params(kp)

    out = jax.block_until_ready(net_forward(x, w1, b1, w2, b2))

    ref = jax.nn.sigmoid(jnp.maximum(x @ w1 + b1, 0.0) @ w2 + b2)
    assert out.shape == (B, 1)
    assert jnp.allclose(out, ref, atol=1e-5), "mismatch vs reference (B=8)"

    # Exercise the padded, multi-tile ("parallel" grid) path.
    B2 = 3000
    x2 = jax.random.normal(kx, (B2, 2), dtype=jnp.float32)
    out2 = jax.block_until_ready(net_forward(x2, w1, b1, w2, b2, tr=8))
    ref2 = jax.nn.sigmoid(jnp.maximum(x2 @ w1 + b1, 0.0) @ w2 + b2)
    assert out2.shape == (B2, 1)
    assert jnp.allclose(out2, ref2, atol=1e-5), "mismatch vs reference (B=3000)"

    print("KERNEL_OK")
</pallas_src>

<mosaic_0001>
module attributes {stable_mosaic.version = 11 : i64} {
  func.func @_net_kernel(%arg0: i32, %arg1: memref<2x8x128xf32, #tpu.memory_space<vmem>>, %arg2: memref<6xf32, #tpu.memory_space<smem>>, %arg3: memref<3xf32, #tpu.memory_space<smem>>, %arg4: memref<3xf32, #tpu.memory_space<smem>>, %arg5: memref<1xf32, #tpu.memory_space<smem>>, %arg6: memref<8x128xf32, #tpu.memory_space<vmem>>) attributes {dimension_semantics = [#tpu.dimension_semantics<parallel>], iteration_bounds = array<i64: 1>, scalar_prefetch = 0 : i64, scratch_operands = 0 : i64, tpu.core_type = #tpu.core_type<tc>, window_params = [{transform_indices = @transform_0, window_bounds = array<i64: 2, 8, 128>}, {transform_indices = @transform_1, window_bounds = array<i64: 6>}, {transform_indices = @transform_2, window_bounds = array<i64: 3>}, {transform_indices = @transform_3, window_bounds = array<i64: 3>}, {transform_indices = @transform_4, window_bounds = array<i64: 1>}, {transform_indices = @transform_5, window_bounds = array<i64: 8, 128>}]} {
    %c0 = arith.constant 0 : index
    %c0_0 = arith.constant 0 : index
    %c0_1 = arith.constant 0 : index
    %0 = vector.load %arg1[%c0, %c0_0, %c0_1] : memref<2x8x128xf32, #tpu.memory_space<vmem>>, vector<1x8x128xf32>
    %1 = vector.shape_cast %0 : vector<1x8x128xf32> to vector<8x128xf32>
    %c1 = arith.constant 1 : index
    %c0_2 = arith.constant 0 : index
    %c0_3 = arith.constant 0 : index
    %2 = vector.load %arg1[%c1, %c0_2, %c0_3] : memref<2x8x128xf32, #tpu.memory_space<vmem>>, vector<1x8x128xf32>
    %3 = vector.shape_cast %2 : vector<1x8x128xf32> to vector<8x128xf32>
    %c0_4 = arith.constant 0 : index
    %4 = memref.load %arg2[%c0_4] : memref<6xf32, #tpu.memory_space<smem>>
    %5 = vector.broadcast %4 : f32 to vector<8x128xf32>
    %6 = arith.mulf %1, %5 : vector<8x128xf32>
    %c3 = arith.constant 3 : index
    %7 = memref.load %arg2[%c3] : memref<6xf32, #tpu.memory_space<smem>>
    %8 = vector.broadcast %7 : f32 to vector<8x128xf32>
    %9 = arith.mulf %3, %8 : vector<8x128xf32>
    %10 = arith.addf %6, %9 : vector<8x128xf32>
    %c0_5 = arith.constant 0 : index
    %11 = memref.load %arg3[%c0_5] : memref<3xf32, #tpu.memory_space<smem>>
    %12 = vector.broadcast %11 : f32 to vector<8x128xf32>
    %13 = arith.addf %10, %12 : vector<8x128xf32>
    %cst = arith.constant 0.000000e+00 : f32
    %14 = vector.broadcast %cst : f32 to vector<8x128xf32>
    %15 = arith.maximumf %13, %14 : vector<8x128xf32>
    %c0_6 = arith.constant 0 : index
    %16 = memref.load %arg4[%c0_6] : memref<3xf32, #tpu.memory_space<smem>>
    %17 = vector.broadcast %16 : f32 to vector<8x128xf32>
    %18 = arith.mulf %15, %17 : vector<8x128xf32>
    %c0_7 = arith.constant 0 : index
    %19 = memref.load %arg5[%c0_7] : memref<1xf32, #tpu.memory_space<smem>>
    %20 = vector.broadcast %19 : f32 to vector<8x128xf32>
    %21 = arith.addf %18, %20 : vector<8x128xf32>
    %c1_8 = arith.constant 1 : index
    %22 = memref.load %arg2[%c1_8] : memref<6xf32, #tpu.memory_space<smem>>
    %23 = vector.broadcast %22 : f32 to vector<8x128xf32>
    %24 = arith.mulf %1, %23 : vector<8x128xf32>
    %c4 = arith.constant 4 : index
    %25 = memref.load %arg2[%c4] : memref<6xf32, #tpu.memory_space<smem>>
    %26 = vector.broadcast %25 : f32 to vector<8x128xf32>
    %27 = arith.mulf %3, %26 : vector<8x128xf32>
    %28 = arith.addf %24, %27 : vector<8x128xf32>
    %c1_9 = arith.constant 1 : index
    %29 = memref.load %arg3[%c1_9] : memref<3xf32, #tpu.memory_space<smem>>
    %30 = vector.broadcast %29 : f32 to vector<8x128xf32>
    %31 = arith.addf %28, %30 : vector<8x128xf32>
    %cst_10 = arith.constant 0.000000e+00 : f32
    %32 = vector.broadcast %cst_10 : f32 to vector<8x128xf32>
    %33 = arith.maximumf %31, %32 : vector<8x128xf32>
    %c1_11 = arith.constant 1 : index
    %34 = memref.load %arg4[%c1_11] : memref<3xf32, #tpu.memory_space<smem>>
    %35 = vector.broadcast %34 : f32 to vector<8x128xf32>
    %36 = arith.mulf %33, %35 : vector<8x128xf32>
    %37 = arith.addf %21, %36 : vector<8x128xf32>
    %c2 = arith.constant 2 : index
    %38 = memref.load %arg2[%c2] : memref<6xf32, #tpu.memory_space<smem>>
    %39 = vector.broadcast %38 : f32 to vector<8x128xf32>
    %40 = arith.mulf %1, %39 : vector<8x128xf32>
    %c5 = arith.constant 5 : index
    %41 = memref.load %arg2[%c5] : memref<6xf32, #tpu.memory_space<smem>>
    %42 = vector.broadcast %41 : f32 to vector<8x128xf32>
    %43 = arith.mulf %3, %42 : vector<8x128xf32>
    %44 = arith.addf %40, %43 : vector<8x128xf32>
    %c2_12 = arith.constant 2 : index
    %45 = memref.load %arg3[%c2_12] : memref<3xf32, #tpu.memory_space<smem>>
    %46 = vector.broadcast %45 : f32 to vector<8x128xf32>
    %47 = arith.addf %44, %46 : vector<8x128xf32>
    %cst_13 = arith.constant 0.000000e+00 : f32
    %48 = vector.broadcast %cst_13 : f32 to vector<8x128xf32>
    %49 = arith.maximumf %47, %48 : vector<8x128xf32>
    %c2_14 = arith.constant 2 : index
    %50 = memref.load %arg4[%c2_14] : memref<3xf32, #tpu.memory_space<smem>>
    %51 = vector.broadcast %50 : f32 to vector<8x128xf32>
    %52 = arith.mulf %49, %51 : vector<8x128xf32>
    %53 = arith.addf %37, %52 : vector<8x128xf32>
    %54 = math.exp %53 : vector<8x128xf32>
    %cst_15 = arith.constant 1.000000e+00 : f32
    %55 = vector.broadcast %cst_15 : f32 to vector<8x128xf32>
    %56 = arith.addf %55, %54 : vector<8x128xf32>
    %57 = tpu.reciprocal %56 : vector<8x128xf32> -> vector<8x128xf32>
    %c0_16 = arith.constant 0 : index
    %c0_17 = arith.constant 0 : index
    %58 = vector.load %arg6[%c0_16, %c0_17] : memref<8x128xf32, #tpu.memory_space<vmem>>, vector<8x128xf32>
    tpu.vector_store %arg6[%c0_16, %c0_17], %57 {strides = array<i32>} : memref<8x128xf32, #tpu.memory_space<vmem>>, vector<8x128xf32>,
    return
  }
  func.func @transform_0(%arg0: i32) -> (i32, i32, i32) {
    %c0_i32 = arith.constant 0 : i32
    %c0_i32_0 = arith.constant 0 : i32
    %c0_i32_1 = arith.constant 0 : i32
    return %c0_i32, %arg0, %c0_i32_0 : i32, i32, i32
  }
  func.func @transform_1(%arg0: i32) -> i32 {
    %c0_i32 = arith.constant 0 : i32
    %c0_i32_0 = arith.constant 0 : i32
    return %c0_i32 : i32
  }
  func.func @transform_2(%arg0: i32) -> i32 {
    %c0_i32 = arith.constant 0 : i32
    %c0_i32_0 = arith.constant 0 : i32
    return %c0_i32 : i32
  }
  func.func @transform_3(%arg0: i32) -> i32 {
    %c0_i32 = arith.constant 0 : i32
    %c0_i32_0 = arith.constant 0 : i32
    return %c0_i32 : i32
  }
  func.func @transform_4(%arg0: i32) -> i32 {
    %c0_i32 = arith.constant 0 : i32
    %c0_i32_0 = arith.constant 0 : i32
    return %c0_i32 : i32
  }
  func.func @transform_5(%arg0: i32) -> (i32, i32) {
    %c0_i32 = arith.constant 0 : i32
    %c0_i32_0 = arith.constant 0 : i32
    return %arg0, %c0_i32 : i32, i32
  }
}

</mosaic_0001>

<llo_original>
// kernel: tpu_custom_call.1
$region0: #{tpu_custom_call.1}
  #allocation0 [shape = 'u32[]', space=smem, size = 0x4, offset = 0x4, fixed_abs, tag = 'smem constant byte address 0x4 - core index']
  #allocation1 [shape = 'u32[144,128]{1,0:T(1,128)}', space=vmem, size = 0x12000, scoped, tag = 'internal scratch']
  #allocation2 [shape = 'f32[1]{0:T(128)S(6)}', space=smem, size = 0x200, scoped, tag = 'scoped memory for tpu_custom_call.1']
  %s0 = inlined_call_operand.hbm [shape: f32[2,8,128], index: 0, kind: input, shape index: {}]
  %s1 = inlined_call_operand.vmem [shape: f32[6], index: 1, kind: input, shape index: {}]
  %s2 = inlined_call_operand.vmem [shape: f32[3], index: 2, kind: input, shape index: {}]
  %s3 = inlined_call_operand.vmem [shape: f32[3], index: 3, kind: input, shape index: {}]
  %s4 = inlined_call_operand.<no memory space> [shape: f32[1], index: 4, kind: input, shape index: {}]
  %s5 = inlined_call_operand.hbm [shape: f32[8,128], index: 5, kind: output, shape index: {}]
  %s6 = sld [smem:[#allocation0]]
  $region46: #{tpu_custom_call.1} parent=0
    _
  %s8 = ssub.s32 1, %s6
  %s9 = scalar_select 0, %s8, %s6
  %10 = sst [smem:[#allocation2]] %s4
  $region1: #{tpu_custom_call.1} parent=0
    #allocation3 [shape = 'u8[8192]{0}', space=vmem, size = 0x2000, scoped, tag = 'input window, operand 0, single buffered']
    #allocation4 [shape = 's32[1]{0}', space=sflag, size = 0x4, scoped, tag = 'scoped memory for tpu_custom_call.1']
    #allocation5 [shape = 's32[1]{0}', space=sflag, size = 0x4, scoped, tag = 'scoped memory for tpu_custom_call.1']
    #allocation6 [shape = 's32[1]{0}', space=sflag, size = 0x4, scoped, tag = 'scoped memory for tpu_custom_call.1']
    #allocation7 [shape = 'u8[512]{0}', space=smem, size = 0x200, scoped, tag = 'input window, operand 1, single buffered']
    #allocation8 [shape = 'u8[512]{0}', space=smem, size = 0x200, scoped, tag = 'input window, operand 2, single buffered']
    #allocation9 [shape = 's32[1]{0}', space=sflag, size = 0x4, scoped, tag = 'scoped memory for tpu_custom_call.1']
    #allocation10 [shape = 'u8[512]{0}', space=smem, size = 0x200, scoped, tag = 'input window, operand 3, single buffered']
    #allocation11 [shape = 'u8[4096]{0}', space=vmem, size = 0x1000, scoped, tag = 'output window, operand 0, single buffered']
    %11 = vsyncpa [#allocation4], 0
    %12 = vsyncpa [#allocation6], 0
    %13 = vsyncpa [#allocation9], 0
    %14 = vsyncpa [#allocation5], 0
    // Predicated region
    $region2: #{tpu_custom_call.1} parent=1 // pred_check
      _
    $region3: #{tpu_custom_call.1} parent=1 // pred_check_branch
      %16 = sbr.rel (0) target = $region5
    $region4: #{tpu_custom_call.1} parent=1 // pred_region
      %s18 = ssub.s32 256, 256
      %19 = vsyncadd [#allocation4], %s18
      %s20 = sshll.u32 [#allocation3], 4
      %s21 = int_to_ptr.vmem [resolvable:$true] %s20
      %26 = dma.hbm_to_vmem [thread:$0]  %s0, 256, %s21, [#allocation4], 128, 128, 8
    $region5: #{tpu_custom_call.1} parent=1 // pred_fallthru
      _
    // Predicated region
    $region6: #{tpu_custom_call.1} parent=1 // pred_check
      _
    $region7: #{tpu_custom_call.1} parent=1 // pred_check_branch
      %28 = sbr.rel (0) target = $region9
    $region8: #{tpu_custom_call.1} parent=1 // pred_region
      %s30 = ssub.s32 16, 16
      %31 = vsyncadd [#allocation6], %s30
      %s33 = sshll.u32 %s1, 4
      %s34 = int_to_ptr.vmem [resolvable:$true] %s33
      %36 = dma.vmem_to_smem %s34, 16, [#allocation7], [#allocation6]
    $region9: #{tpu_custom_call.1} parent=1 // pred_fallthru
      _
    // Predicated region
    $region10: #{tpu_custom_call.1} parent=1 // pred_check
      _
    $region11: #{tpu_custom_call.1} parent=1 // pred_check_branch
      %38 = sbr.rel (0) target = $region13
    $region12: #{tpu_custom_call.1} parent=1 // pred_region
      %s40 = ssub.s32 16, 16
      %41 = vsyncadd [#allocation9], %s40
      %s43 = sshll.u32 %s2, 4
      %s44 = int_to_ptr.vmem [resolvable:$true] %s43
      %46 = dma.vmem_to_smem %s44, 16, [#allocation8], [#allocation9]
    $region13: #{tpu_custom_call.1} parent=1 // pred_fallthru
      _
    // Predicated region
    $region14: #{tpu_custom_call.1} parent=1 // pred_check
      _
    $region15: #{tpu_custom_call.1} parent=1 // pred_check_branch
      %48 = sbr.rel (0) target = $region17
    $region16: #{tpu_custom_call.1} parent=1 // pred_region
      %s50 = ssub.s32 16, 16
      %51 = vsyncadd [#allocation9], %s50
      %s53 = sshll.u32 %s3, 4
      %s54 = int_to_ptr.vmem [resolvable:$true] %s53
      %56 = dma.vmem_to_smem %s54, 16, [#allocation10], [#allocation9]
    $region17: #{tpu_custom_call.1} parent=1 // pred_fallthru
      _
    // Predicated region
    $region18: #{tpu_custom_call.1} parent=1 // pred_check
      _
    $region19: #{tpu_custom_call.1} parent=1 // pred_check_branch
      %58 = sbr.rel (0) target = $region21
    $region20: #{tpu_custom_call.1} parent=1 // pred_region
      _
    $region21: #{tpu_custom_call.1} parent=1 // pred_fallthru
      _
    // Predicated region
    $region22: #{tpu_custom_call.1} parent=1 // pred_check
      _
    $region23: #{tpu_custom_call.1} parent=1 // pred_check_branch
      %60 = sbr.rel (0) target = $region25
    $region24: #{tpu_custom_call.1} parent=1 // pred_region
      %61 = dma.done [#allocation4], 256
    $region25: #{tpu_custom_call.1} parent=1 // pred_fallthru
      _
    // Predicated region
    $region26: #{tpu_custom_call.1} parent=1 // pred_check
      _
    $region27: #{tpu_custom_call.1} parent=1 // pred_check_branch
      %63 = sbr.rel (0) target = $region29
    $region28: #{tpu_custom_call.1} parent=1 // pred_region
      %64 = dma.done [#allocation6], 16
    $region29: #{tpu_custom_call.1} parent=1 // pred_fallthru
      _
    // Predicated region
    $region30: #{tpu_custom_call.1} parent=1 // pred_check
      _
    $region31: #{tpu_custom_call.1} parent=1 // pred_check_branch
      %66 = sbr.rel (0) target = $region33
    $region32: #{tpu_custom_call.1} parent=1 // pred_region
      %67 = dma.done [#allocation9], 16
    $region33: #{tpu_custom_call.1} parent=1 // pred_fallthru
      _
    // Predicated region
    $region34: #{tpu_custom_call.1} parent=1 // pred_check
      _
    $region35: #{tpu_custom_call.1} parent=1 // pred_check_branch
      %69 = sbr.rel (0) target = $region37
    $region36: #{tpu_custom_call.1} parent=1 // pred_region
      %70 = dma.done [#allocation9], 16
    $region37: #{tpu_custom_call.1} parent=1 // pred_fallthru
      _
    %71 = sfence
    %v72 = vld [vmem:[#allocation3] sm:$0xff]
    %s73 = scalar_lea.vmem [#allocation3], 8
    %v74 = vld [vmem:[%s73] sm:$0xff]
    %s75 = sld [smem:[#allocation7]]
    %v76 = vstv %s75
    %v77 = vmul.f32 %v72, %v76
    %s78 = sld [smem:[#allocation7 + $0x3]]
    %v79 = vstv %s78
    %v80 = vmul.f32 %v74, %v79
    %v81 = vadd.f32 %v77, %v80
    %s82 = sld [smem:[#allocation8]]
    %v83 = vstv %s82
    %v84 = vadd.f32 %v81, %v83
    %v85 = vmax.f32 %v84, 0.0
    %s86 = sld [smem:[#allocation10]]
    %v87 = vstv %s86
    %v88 = vmul.f32 %v85, %v87
    %s89 = sld [smem:[#allocation2]]
    %v90 = vstv %s89
    %v91 = vadd.f32 %v88, %v90
    %s92 = sld [smem:[#allocation7 + $0x1]]
    %v93 = vstv %s92
    %v94 = vmul.f32 %v72, %v93
    %s95 = sld [smem:[#allocation7 + $0x4]]
    %v96 = vstv %s95
    %v97 = vmul.f32 %v74, %v96
    %v98 = vadd.f32 %v94, %v97
    %s99 = sld [smem:[#allocation8 + $0x1]]
    %v100 = vstv %s99
    %v101 = vadd.f32 %v98, %v100
    %v102 = vmax.f32 %v101, 0.0
    %s103 = sld [smem:[#allocation10 + $0x1]]
    %v104 = vstv %s103
    %v105 = vmul.f32 %v102, %v104
    %v106 = vadd.f32 %v91, %v105
    %s107 = sld [smem:[#allocation7 + $0x2]]
    %v108 = vstv %s107
    %v109 = vmul.f32 %v72, %v108
    %s110 = sld [smem:[#allocation7 + $0x5]]
    %v111 = vstv %s110
    %v112 = vmul.f32 %v74, %v111
    %v113 = vadd.f32 %v109, %v112
    %s114 = sld [smem:[#allocation8 + $0x2]]
    %v115 = vstv %s114
    %v116 = vadd.f32 %v113, %v115
    %v117 = vmax.f32 %v116, 0.0
    %s118 = sld [smem:[#allocation10 + $0x2]]
    %v119 = vstv %s118
    %v120 = vmul.f32 %v117, %v119
    %v121 = vadd.f32 %v106, %v120
    %v122 = vmul.f32 %v121, 1.442695
    %v123 = vpow.pop %v122
    %v124 = vadd.f32 %v123, 1.0
    %v125 = vrcp.pop %v124
    %126 = vst [vmem:[#allocation11] sm:$0xff] %v125
    // Predicated region
    $region38: #{tpu_custom_call.1} parent=1 // pred_check
      _
    $region39: #{tpu_custom_call.1} parent=1 // pred_check_branch
      %128 = sbr.rel (0) target = $region41
    $region40: #{tpu_custom_call.1} parent=1 // pred_region
      %s130 = ssub.s32 128, 128
      %131 = vsyncadd [#allocation5], %s130
      %s133 = sshll.u32 [#allocation11], 4
      %s134 = int_to_ptr.vmem [resolvable:$true] %s133
      %136 = dma.vmem_to_hbm [thread:$0]  %s134, 128, %s5, [#allocation5]
    $region41: #{tpu_custom_call.1} parent=1 // pred_fallthru
      _
    // Predicated region
    $region42: #{tpu_custom_call.1} parent=1 // pred_check
      _
    $region43: #{tpu_custom_call.1} parent=1 // pred_check_branch
      %138 = sbr.rel (0) target = $region45
    $region44: #{tpu_custom_call.1} parent=1 // pred_region
      %139 = dma.done [#allocation5], 128
    $region45: #{tpu_custom_call.1} parent=1 // pred_fallthru
      _
    %140 = vsyncpa [#allocation4], 1
    %141 = vsyncpa [#allocation5], 1
    %142 = vsyncpa [#allocation6], 1
    %143 = vsyncpa [#allocation9], 1

</llo_original>
